<compile_context>
chip_gen: v7x
topology: tpu7x:2x2x1
jax: 0.10.0
libtpu: 0.0.40
codegen_flags: <defaults>
</compile_context>

<pallas_src>
import functools

import jax
import jax.numpy as jnp
from jax.experimental import pallas as pl
from jax.experimental.pallas import tpu as pltpu


def _round_up(x, m):
    return ((x + m - 1) // m) * m


# ---------------------------------------------------------------------------
# Stage 1: support = X @ W  (tiled over node rows; W resident in VMEM).
# ---------------------------------------------------------------------------
def _xw_kernel(x_ref, w_ref, s_ref):
    s_ref[...] = jnp.dot(
        x_ref[...], w_ref[...], preferred_element_type=jnp.float32
    ).astype(s_ref.dtype)


# ---------------------------------------------------------------------------
# Stage 2: out = A @ support (+ bias), tiled (rows i, contraction k), k last.
# ---------------------------------------------------------------------------
def _make_stage2_kernel(use_bias, resident_support, tk, mxu_dtype):
    def kernel(*refs):
        if use_bias:
            a_ref, s_ref, b_ref, o_ref, acc_ref = refs
        else:
            a_ref, s_ref, o_ref, acc_ref = refs
            b_ref = None

        k = pl.program_id(1)

        @pl.when(k == 0)
        def _():
            if use_bias:
                # Fold the bias into the accumulator init; the epilogue becomes
                # a pure cast + lane-dense store.
                acc_ref[...] = jnp.broadcast_to(b_ref[...], acc_ref.shape).astype(
                    jnp.float32
                )
            else:
                acc_ref[...] = jnp.zeros_like(acc_ref)

        if resident_support:
            # support slab is VMEM-resident; slice out the (tk, fo) block.
            off = pl.multiple_of(k * tk, 128)
            s_blk = s_ref[pl.ds(off, tk), :]
        else:
            s_blk = s_ref[...]

        a_blk = a_ref[...]
        if mxu_dtype is not None:
            a_blk = a_blk.astype(mxu_dtype)  # feed the MXU bf16; acc stays f32

        acc_ref[...] += jnp.dot(a_blk, s_blk, preferred_element_type=jnp.float32)

        @pl.when(k == pl.num_programs(1) - 1)
        def _():
            o_ref[...] = acc_ref[...].astype(o_ref.dtype)

    return kernel


@functools.partial(jax.jit, static_argnames=("use_bias", "mxu_bf16"))
def graph_convolution(adjacency, input_feature, weight, bias=None, *,
                      use_bias=True, mxu_bf16=True):
    """Pallas implementation of GraphConvolution.forward.

    adjacency:     [N, N]       (dense stand-in for torch.sparse; math identical)
    input_feature: [N, F_in]
    weight:        [F_in, F_out]
    bias:          [F_out] or None
    returns:       [N, F_out]
    """
    n, f_in = input_feature.shape
    f_out = weight.shape[1]
    out_dtype = input_feature.dtype

    # ---- Tile selection ----
    # tm: A/output row tile (sublane, multiple of 8).  Keep >= 2 row tiles for
    #     moderate N so the "parallel" axis shards across v7x's 2 TensorCores.
    # tk: contraction tile over nodes (lane dim of A, multiple of 128).
    if n <= 256:
        tm = _round_up(n, 8)
    elif n <= 1024:
        tm = 256
    else:
        tm = 512
    tk = _round_up(n, 128) if n <= 1024 else 1024

    n_row = _round_up(n, tm)
    n_col = _round_up(n, tk)
    fi = _round_up(f_in, 128)   # lane-dense X
    fo = _round_up(f_out, 128)  # lane-dense support/output (unmasked vst, full MXU N)

    support_dtype = jnp.bfloat16 if mxu_bf16 else out_dtype
    mxu_dtype = jnp.bfloat16 if mxu_bf16 else None

    # ---- Pad only the ragged remainder.  A is the dominant HBM operand: when
    # the grid already divides it we pass it straight through (no wrapper copy).
    if n_row == n and n_col == n:
        a_p = adjacency
    else:
        a_p = jnp.pad(adjacency, ((0, n_row - n), (0, n_col - n)))
    if n_col == n and fi == f_in:
        x_p = input_feature
    else:
        x_p = jnp.pad(input_feature, ((0, n_col - n), (0, fi - f_in)))
    if fi == f_in and fo == f_out:
        w_p = weight
    else:
        w_p = jnp.pad(weight, ((0, fi - f_in), (0, fo - f_out)))

    # 48 MiB scoped VMEM: headroom under v7x's 64 MiB physical VMEM, comfortably
    # legal on v5e/v6e (128 MiB) where the default scope is only 16/32 MiB.
    vmem_limit = 48 * 1024 * 1024

    # ---- Stage 1: support = X @ W, computed once, emitted lane-dense (bf16) ----
    ts = tk  # divides n_col by construction; 1024 rows/step for large N
    support = pl.pallas_call(
        _xw_kernel,
        out_shape=jax.ShapeDtypeStruct((n_col, fo), support_dtype),
        grid_spec=pltpu.PrefetchScalarGridSpec(
            num_scalar_prefetch=0,
            grid=(n_col // ts,),
            in_specs=[
                pl.BlockSpec((ts, fi), lambda i: (i, 0)),
                pl.BlockSpec((fi, fo), lambda i: (0, 0)),
            ],
            out_specs=pl.BlockSpec((ts, fo), lambda i: (i, 0)),
        ),
        compiler_params=pltpu.CompilerParams(
            dimension_semantics=("parallel",),
            vmem_limit_bytes=vmem_limit,
        ),
    )(x_p, w_p)

    # ---- Stage 2: out = A @ support (+ bias) ----
    # Keep support VMEM-resident (single DMA per core, no re-reads per row tile)
    # when the slab fits a conservative budget that still leaves room for the
    # double-buffered A / output tiles under v7x's 64 MiB VMEM.
    slab_bytes = n_col * fo * jnp.dtype(support_dtype).itemsize
    resident_support = 2 * slab_bytes <= 24 * 1024 * 1024  # 2x: worst-case buffering

    grid = (n_row // tm, n_col // tk)
    a_spec = pl.BlockSpec((tm, tk), lambda i, k: (i, k))
    if resident_support:
        s_spec = pl.BlockSpec((n_col, fo), lambda i, k: (0, 0))
    else:
        s_spec = pl.BlockSpec((tk, fo), lambda i, k: (k, 0))
    o_spec = pl.BlockSpec((tm, fo), lambda i, k: (i, 0))
    scratch = [pltpu.VMEM((tm, fo), jnp.float32)]
    cparams2 = pltpu.CompilerParams(
        dimension_semantics=("parallel", "arbitrary"),
        vmem_limit_bytes=vmem_limit,
    )

    has_bias = use_bias and bias is not None
    kernel2 = _make_stage2_kernel(has_bias, resident_support, tk, mxu_dtype)

    if has_bias:
        b_p = jnp.zeros((1, fo), jnp.float32).at[0, :f_out].set(
            bias.astype(jnp.float32)
        )
        in_specs = [a_spec, s_spec, pl.BlockSpec((1, fo), lambda i, k: (0, 0))]
        operands = (a_p, support, b_p)
    else:
        in_specs = [a_spec, s_spec]
        operands = (a_p, support)

    out_p = pl.pallas_call(
        kernel2,
        out_shape=jax.ShapeDtypeStruct((n_row, fo), out_dtype),
        grid_spec=pltpu.PrefetchScalarGridSpec(
            num_scalar_prefetch=0,
            grid=grid,
            in_specs=in_specs,
            out_specs=o_spec,
            scratch_shapes=scratch,
        ),
        compiler_params=cparams2,
    )(*operands)

    return out_p[:n, :f_out]


def init_params(key, input_dim, output_dim, use_bias=True):
    """Deterministic re-implementation of reset_parameters().

    kaiming_uniform_ (a=0, fan_in mode) on a [input_dim, output_dim] tensor:
    PyTorch fan_in = size(1) = output_dim, bound = sqrt(6 / fan_in).
    """
    bound = jnp.sqrt(6.0 / output_dim)
    weight = jax.random.uniform(
        key, (input_dim, output_dim), dtype=jnp.float32, minval=-bound, maxval=bound
    )
    bias = jnp.zeros((output_dim,), dtype=jnp.float32) if use_bias else None
    return weight, bias


def _make_adjacency(key, num_nodes):
    """Symmetric row-normalized dense adjacency (stand-in for torch.sparse)."""
    a = jax.random.uniform(key, (num_nodes, num_nodes), dtype=jnp.float32)
    a = (a + a.T) * 0.5 + jnp.eye(num_nodes, dtype=jnp.float32)
    deg = jnp.sum(a, axis=1, keepdims=True)
    return a / deg


if __name__ == "__main__":
    key = jax.random.PRNGKey(0)

    # ---- Test 1: small module-typical shapes, bias on (single-tile path) ----
    num_nodes, input_dim, output_dim = 8, 32, 16
    k_w, k_x, k_a, key = jax.random.split(key, 4)
    weight, bias = init_params(k_w, input_dim, output_dim, use_bias=True)
    x = jax.random.normal(k_x, (num_nodes, input_dim), dtype=jnp.float32)
    adjacency = _make_adjacency(k_a, num_nodes)

    out = graph_convolution(adjacency, x, weight, bias, use_bias=True)
    out = jax.block_until_ready(out)
    ref = adjacency @ (x @ weight) + bias
    assert out.shape == (num_nodes, output_dim)
    # bf16 MXU operands (f32 accumulation) -> ~3 significant digits.
    assert jnp.allclose(out, ref, atol=5e-2, rtol=5e-2), "bias-path mismatch"

    # ---- Test 2: multi-row-tile grid + ragged padding path, no bias ----
    n2, fi2, fo2 = 640, 48, 20
    k_w2, k_x2, k_a2, key = jax.random.split(key, 4)
    weight2, _ = init_params(k_w2, fi2, fo2, use_bias=False)
    x2 = jax.random.normal(k_x2, (n2, fi2), dtype=jnp.float32)
    adjacency2 = _make_adjacency(k_a2, n2)

    out2 = graph_convolution(adjacency2, x2, weight2, None, use_bias=False)
    out2 = jax.block_until_ready(out2)
    ref2 = adjacency2 @ (x2 @ weight2)
    assert out2.shape == (n2, fo2)
    assert jnp.allclose(out2, ref2, atol=5e-2, rtol=5e-2), "tiled-path mismatch"

    print("KERNEL_OK")
</pallas_src>

<mosaic_0001>
module attributes {stable_mosaic.version = 11 : i64} {
  func.func @_xw_kernel(%arg0: i32, %arg1: memref<128x128xf32, #tpu.memory_space<vmem>>, %arg2: memref<128x128xf32, #tpu.memory_space<vmem>>, %arg3: memref<128x128xbf16, #tpu.memory_space<vmem>>) attributes {dimension_semantics = [#tpu.dimension_semantics<parallel>], iteration_bounds = array<i64: 1>, scalar_prefetch = 0 : i64, scratch_operands = 0 : i64, tpu.core_type = #tpu.core_type<tc>, window_params = [{transform_indices = @transform_0, window_bounds = array<i64: 128, 128>}, {pipeline_mode = #tpu.pipeline_mode<synchronous>, transform_indices = @transform_1, window_bounds = array<i64: 128, 128>}, {transform_indices = @transform_2, window_bounds = array<i64: 128, 128>}]} {
    %c0 = arith.constant 0 : index
    %c0_0 = arith.constant 0 : index
    %0 = vector.load %arg1[%c0, %c0_0] : memref<128x128xf32, #tpu.memory_space<vmem>>, vector<128x128xf32>
    %c0_1 = arith.constant 0 : index
    %c0_2 = arith.constant 0 : index
    %1 = vector.load %arg2[%c0_1, %c0_2] : memref<128x128xf32, #tpu.memory_space<vmem>>, vector<128x128xf32>
    %cst = arith.constant dense<0.000000e+00> : vector<128x128xf32>
    %2 = tpu.matmul %0, %1, %cst {dimension_numbers = #tpu.dot_dimension_numbers<[1], [0], [0], [1], [0, 0, 1, 1], [], []>} : vector<128x128xf32>, vector<128x128xf32>, vector<128x128xf32> -> vector<128x128xf32>
    %3 = arith.truncf %2 : vector<128x128xf32> to vector<128x128xbf16>
    %c0_3 = arith.constant 0 : index
    %c0_4 = arith.constant 0 : index
    %4 = vector.load %arg3[%c0_3, %c0_4] : memref<128x128xbf16, #tpu.memory_space<vmem>>, vector<128x128xbf16>
    tpu.vector_store %arg3[%c0_3, %c0_4], %3 {strides = array<i32>} : memref<128x128xbf16, #tpu.memory_space<vmem>>, vector<128x128xbf16>,
    return
  }
  func.func @transform_0(%arg0: i32) -> (i32, i32) {
    %c0_i32 = arith.constant 0 : i32
    %c0_i32_0 = arith.constant 0 : i32
    return %arg0, %c0_i32 : i32, i32
  }
  func.func @transform_1(%arg0: i32) -> (i32, i32) {
    %c0_i32 = arith.constant 0 : i32
    %c0_i32_0 = arith.constant 0 : i32
    %c0_i32_1 = arith.constant 0 : i32
    return %c0_i32, %c0_i32_0 : i32, i32
  }
  func.func @transform_2(%arg0: i32) -> (i32, i32) {
    %c0_i32 = arith.constant 0 : i32
    %c0_i32_0 = arith.constant 0 : i32
    return %arg0, %c0_i32 : i32, i32
  }
}

module attributes {stable_mosaic.version = 11 : i64} {
  func.func @kernel(%arg0: i32, %arg1: i32, %arg2: memref<8x128xf32, #tpu.memory_space<vmem>>, %arg3: memref<128x128xbf16, #tpu.memory_space<vmem>>, %arg4: memref<1x128xf32, #tpu.memory_space<vmem>>, %arg5: memref<8x128xf32, #tpu.memory_space<vmem>>, %arg6: memref<8x128xf32, #tpu.memory_space<vmem>>) attributes {dimension_semantics = [#tpu.dimension_semantics<parallel>, #tpu.dimension_semantics<arbitrary>], iteration_bounds = array<i64: 1, 1>, scalar_prefetch = 0 : i64, scratch_operands = 1 : i64, tpu.core_type = #tpu.core_type<tc>, window_params = [{transform_indices = @transform_0, window_bounds = array<i64: 8, 128>}, {pipeline_mode = #tpu.pipeline_mode<synchronous>, transform_indices = @transform_1, window_bounds = array<i64: 128, 128>}, {pipeline_mode = #tpu.pipeline_mode<synchronous>, transform_indices = @transform_2, window_bounds = array<i64: 1, 128>}, {transform_indices = @transform_3, window_bounds = array<i64: 8, 128>}]} {
    %c0_i32 = arith.constant 0 : i32
    %0 = arith.cmpi eq, %arg1, %c0_i32 : i32
    %1 = arith.extui %0 : i1 to i32
    %c0_i32_0 = arith.constant 0 : i32
    %2 = arith.cmpi ne, %1, %c0_i32_0 : i32
    scf.if %2 {
      %c0_9 = arith.constant 0 : index
      %c0_10 = arith.constant 0 : index
      %16 = vector.load %arg4[%c0_9, %c0_10] : memref<1x128xf32, #tpu.memory_space<vmem>>, vector<1x128xf32>
      %17 = vector.shape_cast %16 : vector<1x128xf32> to vector<1x128xf32>
      %18 = vector.broadcast %17 : vector<1x128xf32> to vector<8x128xf32>
      %c0_11 = arith.constant 0 : index
      %c0_12 = arith.constant 0 : index
      %19 = vector.load %arg6[%c0_11, %c0_12] : memref<8x128xf32, #tpu.memory_space<vmem>>, vector<8x128xf32>
      tpu.vector_store %arg6[%c0_11, %c0_12], %18 {strides = array<i32>} : memref<8x128xf32, #tpu.memory_space<vmem>>, vector<8x128xf32>,
    } else {
    }
    %c128_i32 = arith.constant 128 : i32
    %3 = arith.muli %arg1, %c128_i32 : i32
    %4 = tpu.assume_multiple %3, 128 : i32
    %5 = arith.index_cast %4 : i32 to index
    %c0 = arith.constant 0 : index
    %6 = vector.load %arg3[%5, %c0] : memref<128x128xbf16, #tpu.memory_space<vmem>>, vector<128x128xbf16>
    %c0_1 = arith.constant 0 : index
    %c0_2 = arith.constant 0 : index
    %7 = vector.load %arg2[%c0_1, %c0_2] : memref<8x128xf32, #tpu.memory_space<vmem>>, vector<8x128xf32>
    %8 = arith.truncf %7 : vector<8x128xf32> to vector<8x128xbf16>
    %c0_3 = arith.constant 0 : index
    %c0_4 = arith.constant 0 : index
    %9 = vector.load %arg6[%c0_3, %c0_4] : memref<8x128xf32, #tpu.memory_space<vmem>>, vector<8x128xf32>
    %cst = arith.constant dense<0.000000e+00> : vector<8x128xf32>
    %10 = tpu.matmul %8, %6, %cst {dimension_numbers = #tpu.dot_dimension_numbers<[1], [0], [0], [1], [0, 0, 1, 1], [], []>} : vector<8x128xbf16>, vector<128x128xbf16>, vector<8x128xf32> -> vector<8x128xf32>
    %11 = arith.addf %9, %10 : vector<8x128xf32>
    %c0_5 = arith.constant 0 : index
    %c0_6 = arith.constant 0 : index
    %12 = vector.load %arg6[%c0_5, %c0_6] : memref<8x128xf32, #tpu.memory_space<vmem>>, vector<8x128xf32>
    tpu.vector_store %arg6[%c0_5, %c0_6], %11 {strides = array<i32>} : memref<8x128xf32, #tpu.memory_space<vmem>>, vector<8x128xf32>,
    %c0_i32_7 = arith.constant 0 : i32
    %13 = arith.cmpi eq, %arg1, %c0_i32_7 : i32
    %14 = arith.extui %13 : i1 to i32
    %c0_i32_8 = arith.constant 0 : i32
    %15 = arith.cmpi ne, %14, %c0_i32_8 : i32
    scf.if %15 {
      %c0_9 = arith.constant 0 : index
      %c0_10 = arith.constant 0 : index
      %16 = vector.load %arg6[%c0_9, %c0_10] : memref<8x128xf32, #tpu.memory_space<vmem>>, vector<8x128xf32>
      %c0_11 = arith.constant 0 : index
      %c0_12 = arith.constant 0 : index
      %17 = vector.load %arg5[%c0_11, %c0_12] : memref<8x128xf32, #tpu.memory_space<vmem>>, vector<8x128xf32>
      tpu.vector_store %arg5[%c0_11, %c0_12], %16 {strides = array<i32>} : memref<8x128xf32, #tpu.memory_space<vmem>>, vector<8x128xf32>,
    } else {
    }
    return
  }
  func.func @transform_0(%arg0: i32, %arg1: i32) -> (i32, i32) {
    %c0_i32 = arith.constant 0 : i32
    return %arg0, %arg1 : i32, i32
  }
  func.func @transform_1(%arg0: i32, %arg1: i32) -> (i32, i32) {
    %c0_i32 = arith.constant 0 : i32
    %c0_i32_0 = arith.constant 0 : i32
    %c0_i32_1 = arith.constant 0 : i32
    return %c0_i32, %c0_i32_0 : i32, i32
  }
  func.func @transform_2(%arg0: i32, %arg1: i32) -> (i32, i32) {
    %c0_i32 = arith.constant 0 : i32
    %c0_i32_0 = arith.constant 0 : i32
    %c0_i32_1 = arith.constant 0 : i32
    return %c0_i32, %c0_i32_0 : i32, i32
  }
  func.func @transform_3(%arg0: i32, %arg1: i32) -> (i32, i32) {
    %c0_i32 = arith.constant 0 : i32
    %c0_i32_0 = arith.constant 0 : i32
    return %arg0, %c0_i32 : i32, i32
  }
}

</mosaic_0001>

<llo_original>
// kernel: graph_convolution.2
$region0: #{graph_convolution.2}
  #allocation0 [shape = 'u32[]', space=smem, size = 0x4, offset = 0x4, fixed_abs, tag = 'smem constant byte address 0x4 - core index']
  #allocation1 [shape = 'u32[144,128]{1,0:T(1,128)}', space=vmem, size = 0x12000, scoped, tag = 'internal scratch']
  %s0 = inlined_call_operand.vmem [shape: f32[128,128], index: 0, kind: input, shape index: {}]
  %s1 = inlined_call_operand.vmem [shape: f32[128,128], index: 1, kind: input, shape index: {}]
  %s2 = inlined_call_operand.vmem [shape: bf16[128,128], index: 2, kind: output, shape index: {}]
  %s3 = sld [smem:[#allocation0]]
  $region18: #{graph_convolution.2} parent=0
    _
  %s5 = ssub.s32 1, %s3
  %s6 = scalar_select 0, %s5, %s3
  // Predicated region
  $region2: #{graph_convolution.2} parent=0 // pred_check
    _
  $region3: #{graph_convolution.2} parent=0 // pred_check_branch
    %8 = sbr.rel (0) target = $region5
  $region4: #{graph_convolution.2} parent=0 // pred_region
    _
  $region5: #{graph_convolution.2} parent=0 // pred_fallthru
    _
  // Predicated region
  $region6: #{graph_convolution.2} parent=0 // pred_check
    _
  $region7: #{graph_convolution.2} parent=0 // pred_check_branch
    %10 = sbr.rel (0) target = $region9
  $region8: #{graph_convolution.2} parent=0 // pred_region
    _
  $region9: #{graph_convolution.2} parent=0 // pred_fallthru
    _
  %v11 = vld [vmem:[%s0] sm:$0xff]
  %v12 = vld [vmem:[%s0 + $0x8] sm:$0xff]
  %v13 = vld [vmem:[%s0 + $0x10] sm:$0xff]
  %v14 = vld [vmem:[%s0 + $0x18] sm:$0xff]
  %v15 = vld [vmem:[%s0 + $0x20] sm:$0xff]
  %v16 = vld [vmem:[%s0 + $0x28] sm:$0xff]
  %v17 = vld [vmem:[%s0 + $0x30] sm:$0xff]
  %v18 = vld [vmem:[%s0 + $0x38] sm:$0xff]
  %v19 = vld [vmem:[%s0 + $0x40] sm:$0xff]
  %v20 = vld [vmem:[%s0 + $0x48] sm:$0xff]
  %v21 = vld [vmem:[%s0 + $0x50] sm:$0xff]
  %v22 = vld [vmem:[%s0 + $0x58] sm:$0xff]
  %v23 = vld [vmem:[%s0 + $0x60] sm:$0xff]
  %v24 = vld [vmem:[%s0 + $0x68] sm:$0xff]
  %v25 = vld [vmem:[%s0 + $0x70] sm:$0xff]
  %v26 = vld [vmem:[%s0 + $0x78] sm:$0xff]
  %v27 = vld [vmem:[%s1] sm:$0xff]
  %v28 = vld [vmem:[%s1 + $0x8] sm:$0xff]
  %v29 = vld [vmem:[%s1 + $0x10] sm:$0xff]
  %v30 = vld [vmem:[%s1 + $0x18] sm:$0xff]
  %v31 = vld [vmem:[%s1 + $0x20] sm:$0xff]
  %v32 = vld [vmem:[%s1 + $0x28] sm:$0xff]
  %v33 = vld [vmem:[%s1 + $0x30] sm:$0xff]
  %v34 = vld [vmem:[%s1 + $0x38] sm:$0xff]
  %v35 = vld [vmem:[%s1 + $0x40] sm:$0xff]
  %v36 = vld [vmem:[%s1 + $0x48] sm:$0xff]
  %v37 = vld [vmem:[%s1 + $0x50] sm:$0xff]
  %v38 = vld [vmem:[%s1 + $0x58] sm:$0xff]
  %v39 = vld [vmem:[%s1 + $0x60] sm:$0xff]
  %v40 = vld [vmem:[%s1 + $0x68] sm:$0xff]
  %v41 = vld [vmem:[%s1 + $0x70] sm:$0xff]
  %v42 = vld [vmem:[%s1 + $0x78] sm:$0xff]
  %43 = vmatprep.subr.mxu0 0.0
  %44 = vmatpush1.msra.mxu0 %v27
  %45 = vmatprep.subr.mxu0 0.0
  %46 = vmatpush1.msra.mxu0 %v28
  %47 = vmatprep.subr.mxu0 0.0
  %48 = vmatpush1.msra.mxu0 %v29
  %49 = vmatprep.subr.mxu0 0.0
  %50 = vmatpush1.msra.mxu0 %v30
  %51 = vmatprep.subr.mxu0 0.0
  %52 = vmatpush1.msra.mxu0 %v31
  %53 = vmatprep.subr.mxu0 0.0
  %54 = vmatpush1.msra.mxu0 %v32
  %55 = vmatprep.subr.mxu0 0.0
  %56 = vmatpush1.msra.mxu0 %v33
  %57 = vmatprep.subr.mxu0 0.0
  %58 = vmatpush1.msra.mxu0 %v34
  %59 = vmatprep.subr.mxu0 0.0
  %60 = vmatpush1.msra.mxu0 %v35
  %61 = vmatprep.subr.mxu0 0.0
  %62 = vmatpush1.msra.mxu0 %v36
  %63 = vmatprep.subr.mxu0 0.0
  %64 = vmatpush1.msra.mxu0 %v37
  %65 = vmatprep.subr.mxu0 0.0
  %66 = vmatpush1.msra.mxu0 %v38
  %67 = vmatprep.subr.mxu0 0.0
  %68 = vmatpush1.msra.mxu0 %v39
  %69 = vmatprep.subr.mxu0 0.0
  %70 = vmatpush1.msra.mxu0 %v40
  %71 = vmatprep.subr.mxu0 0.0
  %72 = vmatpush1.msra.mxu0 %v41
  %73 = vmatprep.subr.mxu0 0.0
  %74 = vmatpush1.msra.mxu0 %v42
  %75 = vmatprep.subr.mxu0 0.0
  %76 = vmatpush1.msra.mxu0 0.0
  %77 = vmatprep.subr.mxu0 0.0
  %78 = vmatpush1.msra.mxu0 0.0
  %79 = vmatprep.subr.mxu0 0.0
  %80 = vmatpush1.msra.mxu0 0.0
  %81 = vmatprep.subr.mxu0 0.0
  %82 = vmatpush1.msra.mxu0 0.0
  %83 = vmatprep.subr.mxu0 0.0
  %84 = vmatpush1.msra.mxu0 0.0
  %85 = vmatprep.subr.mxu0 0.0
  %86 = vmatpush1.msra.mxu0 0.0
  %87 = vmatprep.subr.mxu0 0.0
  %88 = vmatpush1.msra.mxu0 0.0
  %89 = vmatprep.subr.mxu0 0.0
  %90 = vmatpush1.msra.mxu0 0.0
  %91 = vmatprep.subr.mxu0 0.0
  %92 = vmatpush1.msra.mxu0 0.0
  %93 = vmatprep.subr.mxu0 0.0
  %94 = vmatpush1.msra.mxu0 0.0
  %95 = vmatprep.subr.mxu0 0.0
  %96 = vmatpush1.msra.mxu0 0.0
  %97 = vmatprep.subr.mxu0 0.0
  %98 = vmatpush1.msra.mxu0 0.0
  %99 = vmatprep.subr.mxu0 0.0
  %100 = vmatpush1.msra.mxu0 0.0
  %101 = vmatprep.subr.mxu0 0.0
  %102 = vmatpush1.msra.mxu0 0.0
  %103 = vmatprep.subr.mxu0 0.0
  %104 = vmatpush1.msra.mxu0 0.0
  %105 = vmatprep.subr.mxu0 0.0
  %106 = vmatpush1.msra.mxu0 0.0
  %107 = vmatprep.mubr.f32.mxu0 0.0
  %108 = vmatmul.mubr.f32.gmra.mrb[0].mxu0 %v11
  %v109 = vpop.f32.mrb[0].mxu0
  %v110 = vadd.f32 0.0, %v109
  %v111 = vpop.f32.mrb[0].mxu0
  %112 = vmatprep.mubr.f32.mxu0 0.0
  %113 = vmatmul.mubr.f32.gmra.mrb[0].mxu0 %v12
  %v114 = vpop.f32.mrb[0].mxu0
  %v115 = vadd.f32 0.0, %v114
  %v116 = vpop.f32.mrb[0].mxu0
  %117 = vmatprep.mubr.f32.mxu0 0.0
  %118 = vmatmul.mubr.f32.gmra.mrb[0].mxu0 %v13
  %v119 = vpop.f32.mrb[0].mxu0
  %v120 = vadd.f32 0.0, %v119
  %v121 = vpop.f32.mrb[0].mxu0
  %122 = vmatprep.mubr.f32.mxu0 0.0
  %123 = vmatmul.mubr.f32.gmra.mrb[0].mxu0 %v14
  %v124 = vpop.f32.mrb[0].mxu0
  %v125 = vadd.f32 0.0, %v124
  %v126 = vpop.f32.mrb[0].mxu0
  %127 = vmatprep.mubr.f32.mxu0 0.0
  %128 = vmatmul.mubr.f32.gmra.mrb[0].mxu0 %v15
  %v129 = vpop.f32.mrb[0].mxu0
  %v130 = vadd.f32 0.0, %v129
  %v131 = vpop.f32.mrb[0].mxu0
  %132 = vmatprep.mubr.f32.mxu0 0.0
  %133 = vmatmul.mubr.f32.gmra.mrb[0].mxu0 %v16
  %v134 = vpop.f32.mrb[0].mxu0
  %v135 = vadd.f32 0.0, %v134
  %v136 = vpop.f32.mrb[0].mxu0
  %137 = vmatprep.mubr.f32.mxu0 0.0
  %138 = vmatmul.mubr.f32.gmra.mrb[0].mxu0 %v17
  %v139 = vpop.f32.mrb[0].mxu0
  %v140 = vadd.f32 0.0, %v139
  %v141 = vpop.f32.mrb[0].mxu0
  %142 = vmatprep.mubr.f32.mxu0 0.0
  %143 = vmatmul.mubr.f32.gmra.mrb[0].mxu0 %v18
  %v144 = vpop.f32.mrb[0].mxu0
  %v145 = vadd.f32 0.0, %v144
  %v146 = vpop.f32.mrb[0].mxu0
  %147 = vmatprep.mubr.f32.mxu0 0.0
  %148 = vmatmul.mubr.f32.gmra.mrb[0].mxu0 %v19
  %v149 = vpop.f32.mrb[0].mxu0
  %v150 = vadd.f32 0.0, %v149
  %v151 = vpop.f32.mrb[0].mxu0
  %152 = vmatprep.mubr.f32.mxu0 0.0
  %153 = vmatmul.mubr.f32.gmra.mrb[0].mxu0 %v20
  %v154 = vpop.f32.mrb[0].mxu0
  %v155 = vadd.f32 0.0, %v154
  %v156 = vpop.f32.mrb[0].mxu0
  %157 = vmatprep.mubr.f32.mxu0 0.0
  %158 = vmatmul.mubr.f32.gmra.mrb[0].mxu0 %v21
  %v159 = vpop.f32.mrb[0].mxu0
  %v160 = vadd.f32 0.0, %v159
  %v161 = vpop.f32.mrb[0].mxu0
  %162 = vmatprep.mubr.f32.mxu0 0.0
  %163 = vmatmul.mubr.f32.gmra.mrb[0].mxu0 %v22
  %v164 = vpop.f32.mrb[0].mxu0
  %v165 = vadd.f32 0.0, %v164
  %v166 = vpop.f32.mrb[0].mxu0
  %167 = vmatprep.mubr.f32.mxu0 0.0
  %168 = vmatmul.mubr.f32.gmra.mrb[0].mxu0 %v23
  %v169 = vpop.f32.mrb[0].mxu0
  %v170 = vadd.f32 0.0, %v169
  %v171 = vpop.f32.mrb[0].mxu0
  %172 = vmatprep.mubr.f32.mxu0 0.0
  %173 = vmatmul.mubr.f32.gmra.mrb[0].mxu0 %v24
  %v174 = vpop.f32.mrb[0].mxu0
  %v175 = vadd.f32 0.0, %v174
  %v176 = vpop.f32.mrb[0].mxu0
  %177 = vmatprep.mubr.f32.mxu0 0.0
  %178 = vmatmul.mubr.f32.gmra.mrb[0].mxu0 %v25
  %v179 = vpop.f32.mrb[0].mxu0
  %v180 = vadd.f32 0.0, %v179
  %v181 = vpop.f32.mrb[0].mxu0
  %182 = vmatprep.mubr.f32.mxu0 0.0
  %183 = vmatmul.mubr.f32.gmra.mrb[0].mxu0 %v26
  %v184 = vpop.f32.mrb[0].mxu0
  %v185 = vadd.f32 0.0, %v184
  %v186 = vpop.f32.mrb[0].mxu0
  %187 = vdwg.mxu0
  %v188 = vpack.c.bf16 %v115, %v110
  %v189 = vpack.c.bf16 %v125, %v120
  %v190 = vpack.c.bf16 %v135, %v130
  %v191 = vpack.c.bf16 %v145, %v140
  %v192 = vpack.c.bf16 %v155, %v150
  %v193 = vpack.c.bf16 %v165, %v160
  %v194 = vpack.c.bf16 %v175, %v170
  %v195 = vpack.c.bf16 %v185, %v180
  %v204 = vunpack.c.l.b16 %v188
  %v205 = vunpack.c.h.b16 %v188
  %v206 = vunpack.c.l.b16 %v189
  %v207 = vunpack.c.h.b16 %v189
  %v208 = vunpack.c.l.b16 %v190
  %v209 = vunpack.c.h.b16 %v190
  %v210 = vunpack.c.l.b16 %v191
  %v211 = vunpack.c.h.b16 %v191
  %v212 = vunpack.c.l.b16 %v192
  %v213 = vunpack.c.h.b16 %v192
  %v214 = vunpack.c.l.b16 %v193
  %v215 = vunpack.c.h.b16 %v193
  %v216 = vunpack.c.l.b16 %v194
  %v217 = vunpack.c.h.b16 %v194
  %v218 = vunpack.c.l.b16 %v195
  %v219 = vunpack.c.h.b16 %v195
  %v220 = vpack.c.b16 %v204, %v204
  %v221 = vpack.c.b16 %v205, %v205
  %v222 = vpack.c.b16 %v206, %v206
  %v223 = vpack.c.b16 %v207, %v207
  %v224 = vpack.c.b16 %v208, %v208
  %v225 = vpack.c.b16 %v209, %v209
  %v226 = vpack.c.b16 %v210, %v210
  %v227 = vpack.c.b16 %v211, %v211
  %v228 = vpack.c.b16 %v212, %v212
  %v229 = vpack.c.b16 %v213, %v213
  %v230 = vpack.c.b16 %v214, %v214
  %v231 = vpack.c.b16 %v215, %v215
  %v232 = vpack.c.b16 %v216, %v216
  %v233 = vpack.c.b16 %v217, %v217
  %v234 = vpack.c.b16 %v218, %v218
  %v235 = vpack.c.b16 %v219, %v219
  %252 = vst [vmem:[%s2] sm:$0xf] %v220
  %253 = vst [vmem:[%s2 + $0x4] sm:$0xf] %v221
  %254 = vst [vmem:[%s2 + $0x8] sm:$0xf] %v222
  %255 = vst [vmem:[%s2 + $0xc] sm:$0xf] %v223
  %256 = vst [vmem:[%s2 + $0x10] sm:$0xf] %v224
  %257 = vst [vmem:[%s2 + $0x14] sm:$0xf] %v225
  %258 = vst [vmem:[%s2 + $0x18] sm:$0xf] %v226
  %259 = vst [vmem:[%s2 + $0x1c] sm:$0xf] %v227
  %260 = vst [vmem:[%s2 + $0x20] sm:$0xf] %v228
  %261 = vst [vmem:[%s2 + $0x24] sm:$0xf] %v229
  %262 = vst [vmem:[%s2 + $0x28] sm:$0xf] %v230
  %263 = vst [vmem:[%s2 + $0x2c] sm:$0xf] %v231
  %264 = vst [vmem:[%s2 + $0x30] sm:$0xf] %v232
  %265 = vst [vmem:[%s2 + $0x34] sm:$0xf] %v233
  %266 = vst [vmem:[%s2 + $0x38] sm:$0xf] %v234
  %267 = vst [vmem:[%s2 + $0x3c] sm:$0xf] %v235
  // Predicated region
  $region10: #{graph_convolution.2} parent=0 // pred_check
    _
  $region11: #{graph_convolution.2} parent=0 // pred_check_branch
    %269 = sbr.rel (0) target = $region13
  $region12: #{graph_convolution.2} parent=0 // pred_region
    _
  $region13: #{graph_convolution.2} parent=0 // pred_fallthru
    _
  // Predicated region
  $region14: #{graph_convolution.2} parent=0 // pred_check
    _
  $region15: #{graph_convolution.2} parent=0 // pred_check_branch
    %271 = sbr.rel (0) target = $region17
  $region16: #{graph_convolution.2} parent=0 // pred_region
    _
  $region17: #{graph_convolution.2} parent=0 // pred_fallthru
    _

// kernel: graph_convolution.3
$region0: #{graph_convolution.3}
  #allocation0 [shape = 'u32[]', space=smem, size = 0x4, offset = 0x4, fixed_abs, tag = 'smem constant byte address 0x4 - core index']
  #allocation1 [shape = 'u32[144,128]{1,0:T(1,128)}', space=vmem, size = 0x12000, scoped, tag = 'internal scratch']
  #allocation2 [shape = 'f32[8,128]{1,0:T(8,128)}', space=vmem, size = 0x1000, scoped, tag = 'scratch operand']
  %s0 = inlined_call_operand.vmem [shape: f32[8,128], index: 0, kind: input, shape index: {}]
  %s1 = inlined_call_operand.vmem [shape: bf16[128,128], index: 1, kind: input, shape index: {}]
  %s2 = inlined_call_operand.vmem [shape: f32[1,128], index: 2, kind: input, shape index: {}]
  %s3 = inlined_call_operand.hbm [shape: f32[8,128], index: 3, kind: output, shape index: {}]
  %s4 = sld [smem:[#allocation0]]
  $region30: #{graph_convolution.3} parent=0
    _
  %s6 = ssub.s32 1, %s4
  %s7 = scalar_select 0, %s6, %s4
  $region1: #{graph_convolution.3} parent=0
    #allocation3 [shape = 'u8[4096]{0}', space=vmem, size = 0x1000, scoped, tag = 'output window, operand 0, single buffered']
    #allocation4 [shape = 's32[1]{0}', space=sflag, size = 0x4, scoped, tag = 'scoped memory for graph_convolution.3']
    %8 = vsyncpa [#allocation4], 0
    // Predicated region
    $region2: #{graph_convolution.3} parent=1 // pred_check
      _
    $region3: #{graph_convolution.3} parent=1 // pred_check_branch
      %10 = sbr.rel (0) target = $region5
    $region4: #{graph_convolution.3} parent=1 // pred_region
      _
    $region5: #{graph_convolution.3} parent=1 // pred_fallthru
      _
    // Predicated region
    $region6: #{graph_convolution.3} parent=1 // pred_check
      _
    $region7: #{graph_convolution.3} parent=1 // pred_check_branch
      %12 = sbr.rel (0) target = $region9
    $region8: #{graph_convolution.3} parent=1 // pred_region
      _
    $region9: #{graph_convolution.3} parent=1 // pred_fallthru
      _
    // Predicated region
    $region10: #{graph_convolution.3} parent=1 // pred_check
      _
    $region11: #{graph_convolution.3} parent=1 // pred_check_branch
      %14 = sbr.rel (0) target = $region13
    $region12: #{graph_convolution.3} parent=1 // pred_region
      _
    $region13: #{graph_convolution.3} parent=1 // pred_fallthru
      _
    %p16 = scmp.eq.s32.totalorder 0, 0
    // Predicated region
    $region14: #{graph_convolution.3} parent=1 // pred_check
      %p17 = pneg %p16
    $region15: #{graph_convolution.3} parent=1 // pred_check_branch
      %19 = sbr.rel (%p17) target = $region17
    $region16: #{graph_convolution.3} parent=1 // pred_region
      %v20 = vld [vmem:[%s2] sm:$0x1]
      %v22 = vlaneseq
      %v23 = vshrl.u32 %v22, 7
      %v24 = vsub.s32 0, %v23
      %v25 = vrot.slane %v20, %v24
      %27 = vst [vmem:[#allocation2] sm:$0xff] %v25
    $region17: #{graph_convolution.3} parent=1 // pred_fallthru
      _
    %s28 = smul.u32 0, 128
    %s29 = sshra.s32 %s28, 3
    %s30 = sand.u32 %s28, 7
    %s31 = smul.addr %s29, 4
    %s32 = scalar_lea.vmem %s1, %s31
    %v33 = vld [vmem:[%s32] sm:$0xf]
    %v34 = vld [vmem:[%s32 + $0x4] sm:$0xf]
    %v35 = vld [vmem:[%s32 + $0x8] sm:$0xf]
    %v36 = vld [vmem:[%s32 + $0xc] sm:$0xf]
    %v37 = vld [vmem:[%s32 + $0x10] sm:$0xf]
    %v38 = vld [vmem:[%s32 + $0x14] sm:$0xf]
    %v39 = vld [vmem:[%s32 + $0x18] sm:$0xf]
    %v40 = vld [vmem:[%s32 + $0x1c] sm:$0xf]
    %v41 = vld [vmem:[%s32 + $0x20] sm:$0xf]
    %v42 = vld [vmem:[%s32 + $0x24] sm:$0xf]
    %v43 = vld [vmem:[%s32 + $0x28] sm:$0xf]
    %v44 = vld [vmem:[%s32 + $0x2c] sm:$0xf]
    %v45 = vld [vmem:[%s32 + $0x30] sm:$0xf]
    %v46 = vld [vmem:[%s32 + $0x34] sm:$0xf]
    %v47 = vld [vmem:[%s32 + $0x38] sm:$0xf]
    %v48 = vld [vmem:[%s32 + $0x3c] sm:$0xf]
    %v49 = vld [vmem:[%s0] sm:$0xff]
    %v50 = vpack.c.bf16 %v49, %v49
    %v51 = vld [vmem:[#allocation2] sm:$0xff]
    %v68 = vunpack.c.l.b16 %v33
    %v69 = vunpack.c.l.b16 %v34
    %v70 = vunpack.c.l.b16 %v35
    %v71 = vunpack.c.l.b16 %v36
    %v72 = vunpack.c.l.b16 %v37
    %v73 = vunpack.c.l.b16 %v38
    %v74 = vunpack.c.l.b16 %v39
    %v75 = vunpack.c.l.b16 %v40
    %v76 = vunpack.c.l.b16 %v41
    %v77 = vunpack.c.l.b16 %v42
    %v78 = vunpack.c.l.b16 %v43
    %v79 = vunpack.c.l.b16 %v44
    %v80 = vunpack.c.l.b16 %v45
    %v81 = vunpack.c.l.b16 %v46
    %v82 = vunpack.c.l.b16 %v47
    %v83 = vunpack.c.l.b16 %v48
    %v84 = vpack.c.b16 %v69, %v68
    %v85 = vpack.c.b16 %v71, %v70
    %v86 = vpack.c.b16 %v73, %v72
    %v87 = vpack.c.b16 %v75, %v74
    %v88 = vpack.c.b16 %v77, %v76
    %v89 = vpack.c.b16 %v79, %v78
    %v90 = vpack.c.b16 %v81, %v80
    %v91 = vpack.c.b16 %v83, %v82
    %100 = vmatprep.subr.bf16.mxu0 0
    %101 = vmatpush1.bf16.msra.mxu0 %v84
    %102 = vmatprep.subr.bf16.mxu0 0
    %103 = vmatpush1.bf16.msra.mxu0 %v85
    %104 = vmatprep.subr.bf16.mxu0 0
    %105 = vmatpush1.bf16.msra.mxu0 %v86
    %106 = vmatprep.subr.bf16.mxu0 0
    %107 = vmatpush1.bf16.msra.mxu0 %v87
    %108 = vmatprep.subr.bf16.mxu0 0
    %109 = vmatpush1.bf16.msra.mxu0 %v88
    %110 = vmatprep.subr.bf16.mxu0 0
    %111 = vmatpush1.bf16.msra.mxu0 %v89
    %112 = vmatprep.subr.bf16.mxu0 0
    %113 = vmatpush1.bf16.msra.mxu0 %v90
    %114 = vmatprep.subr.bf16.mxu0 0
    %115 = vmatpush1.bf16.msra.mxu0 %v91
    %116 = vmatprep.subr.bf16.mxu0 0
    %117 = vmatpush1.bf16.msra.mxu0 0
    %118 = vmatprep.subr.bf16.mxu0 0
    %119 = vmatpush1.bf16.msra.mxu0 0
    %120 = vmatprep.subr.bf16.mxu0 0
    %121 = vmatpush1.bf16.msra.mxu0 0
    %122 = vmatprep.subr.bf16.mxu0 0
    %123 = vmatpush1.bf16.msra.mxu0 0
    %124 = vmatprep.subr.bf16.mxu0 0
    %125 = vmatpush1.bf16.msra.mxu0 0
    %126 = vmatprep.subr.bf16.mxu0 0
    %127 = vmatpush1.bf16.msra.mxu0 0
    %128 = vmatprep.subr.bf16.mxu0 0
    %129 = vmatpush1.bf16.msra.mxu0 0
    %130 = vmatprep.subr.bf16.mxu0 0
    %131 = vmatpush1.bf16.msra.mxu0 0
    %132 = vmatprep.mubr.bf16.mxu0 0
    %133 = vmatmul.mubr.bf16.gmra.mrb[0].mxu0 %v50
    %v134 = vpop.f32.mrb[0].mxu0
    %v135 = vadd.f32 0.0, %v134
    %v136 = vpop.f32.mrb[0].mxu0
    %v137 = vpop.f32.mrb[0].mxu0
    %v138 = vpop.f32.mrb[0].mxu0
    %139 = vdwg.mxu0
    %v140 = vadd.f32 %v51, %v135
    %141 = vst [vmem:[#allocation2] sm:$0xff] %v140
    // Predicated region
    $region18: #{graph_convolution.3} parent=1 // pred_check
      %p142 = pneg %p16
    $region19: #{graph_convolution.3} parent=1 // pred_check_branch
      %144 = sbr.rel (%p142) target = $region21
    $region20: #{graph_convolution.3} parent=1 // pred_region
      %v145 = vld [vmem:[#allocation2] sm:$0xff]
      %146 = vst [vmem:[#allocation3] sm:$0xff] %v145
    $region21: #{graph_convolution.3} parent=1 // pred_fallthru
      _
    // Predicated region
    $region22: #{graph_convolution.3} parent=1 // pred_check
      _
    $region23: #{graph_convolution.3} parent=1 // pred_check_branch
      %148 = sbr.rel (0) target = $region25
    $region24: #{graph_convolution.3} parent=1 // pred_region
      %s150 = ssub.s32 128, 128
      %151 = vsyncadd [#allocation4], %s150
      %s153 = sshll.u32 [#allocation3], 4
      %s154 = int_to_ptr.vmem [resolvable:$true] %s153
      %156 = dma.vmem_to_hbm [thread:$0]  %s154, 128, %s3, [#allocation4]
    $region25: #{graph_convolution.3} parent=1 // pred_fallthru
      _
    // Predicated region
    $region26: #{graph_convolution.3} parent=1 // pred_check
      _
    $region27: #{graph_convolution.3} parent=1 // pred_check_branch
      %158 = sbr.rel (0) target = $region29
    $region28: #{graph_convolution.3} parent=1 // pred_region
      %159 = dma.done [#allocation4], 128
    $region29: #{graph_convolution.3} parent=1 // pred_fallthru
      _
    %160 = vsyncpa [#allocation4], 1

</llo_original>
